<compile_context>
chip_gen: v5e
topology: v5e:2x2
jax: 0.10.0
libtpu: 0.0.40
codegen_flags: <defaults>
</compile_context>

<pallas_src>
import functools

import jax
import jax.numpy as jnp
from jax.experimental import pallas as pl
from jax.experimental.pallas import tpu as pltpu


_LANE = 128
_SUBLANE = 8
_VMEM_BUDGET = 48 * 1024 * 1024  # v7x-safe budget (64 MiB physical per TC)


def _round_up(x, m):
    return (x + m - 1) // m * m


# ----------------------------------------------------------------------------
# Kernels
# ----------------------------------------------------------------------------
def _fcn_eval_kernel(x_ref, w_ref, b_ref, o_ref):
    # [tm, cin_p] @ [cin_p, cout_p] on the MXU, f32 accumulation.
    y = jnp.dot(x_ref[...], w_ref[...], preferred_element_type=jnp.float32)
    o_ref[...] = (y + b_ref[...]).astype(o_ref.dtype)


def _fcn_train_kernel(x_ref, w_ref, b_ref, u_ref, o_ref, *, p):
    # W and b already carry the 1/(1-p) scale (folded in the wrapper), so the
    # kernel only needs a compare + select — no per-element scale multiply.
    y = jnp.dot(x_ref[...], w_ref[...], preferred_element_type=jnp.float32)
    y = y + b_ref[...]
    keep = u_ref[...] >= jnp.float32(p)
    o_ref[...] = jnp.where(keep, y, jnp.zeros_like(y)).astype(o_ref.dtype)


# ----------------------------------------------------------------------------
# Wrapper
# ----------------------------------------------------------------------------
def fcn_forward(x, w_t, b, *, training=False, p=0.5, dropout_key=None,
                compute_dtype=None):
    """Pallas implementation of FCN.forward.

    x   : [B, cin]     (activations; feature dim last -> lanes)
    w_t : [cin, cout]  (transpose of PyTorch nn.Linear weight)
    b   : [cout]
    compute_dtype : dtype for the matmul operands (e.g. jnp.bfloat16 on
                    v6e/v7x); accumulation is always f32.
    """
    B, cin = x.shape
    cin_w, cout = w_t.shape
    assert cin_w == cin, "weight/activation shape mismatch"
    out_dtype = x.dtype
    compute_dtype = compute_dtype or x.dtype

    if training and p == 0.0:
        training = False  # dropout disabled -> identity, skip mask work
    if training:
        assert 0.0 <= p < 1.0, "dropout p must be in [0, 1)"

    # Lane-dense padded sizes.
    cin_p = _round_up(cin, _LANE)
    cout_p = _round_up(cout, _LANE)
    b_p8 = _round_up(B, _SUBLANE)

    # Batch tile size, shrunk until the VMEM footprint fits the v7x budget
    # (resident weight + double-buffered x / out / mask tiles).
    cd_bytes = jnp.dtype(compute_dtype).itemsize
    out_bytes = jnp.dtype(out_dtype).itemsize

    def _footprint(tm_):
        w_b = cin_p * cout_p * cd_bytes * 2        # weight (count 2x for safety)
        x_b = tm_ * cin_p * cd_bytes * 2           # double-buffered
        o_b = tm_ * cout_p * out_bytes * 2
        u_b = (tm_ * cout_p * 4 * 2) if training else 0
        bias_b = cout_p * 4 * 2
        return w_b + x_b + o_b + u_b + bias_b

    tm = min(b_p8, 512)
    tm = _round_up(tm, _SUBLANE)
    while tm > _SUBLANE and _footprint(tm) > _VMEM_BUDGET:
        tm = _round_up(max(tm // 2, _SUBLANE), _SUBLANE)
    # TODO(synk): if the resident weight alone exceeds the VMEM budget, add a
    # cout grid axis (column tiling); not needed at these sizes.

    b_pad = _round_up(b_p8, tm)
    nb = b_pad // tm

    # Host-side prep: pad to lane-dense shapes, cast to compute dtype, fold the
    # 1/(1-p) dropout scale into W and b (training only).
    scale = (1.0 / (1.0 - p)) if training else 1.0
    x_p = jnp.zeros((b_pad, cin_p), compute_dtype).at[:B, :cin].set(
        x.astype(compute_dtype))
    w_p = jnp.zeros((cin_p, cout_p), compute_dtype).at[:cin, :cout].set(
        (w_t.astype(jnp.float32) * scale).astype(compute_dtype))
    b_p = jnp.zeros((1, cout_p), jnp.float32).at[0, :cout].set(
        b.astype(jnp.float32) * scale)

    x_spec = pl.BlockSpec((tm, cin_p), lambda i: (i, 0))
    w_spec = pl.BlockSpec((cin_p, cout_p), lambda i: (0, 0))   # VMEM-resident
    bias_spec = pl.BlockSpec((1, cout_p), lambda i: (0, 0))
    o_spec = pl.BlockSpec((tm, cout_p), lambda i: (i, 0))
    out_shape = jax.ShapeDtypeStruct((b_pad, cout_p), out_dtype)

    cparams = pltpu.CompilerParams(
        dimension_semantics=("parallel",),      # megacore sharding on v7x
        vmem_limit_bytes=_VMEM_BUDGET,
    )

    if not training:
        y_pad = pl.pallas_call(
            _fcn_eval_kernel,
            out_shape=out_shape,
            grid=(nb,),
            in_specs=[x_spec, w_spec, bias_spec],
            out_specs=o_spec,
            compiler_params=cparams,
        )(x_p, w_p, b_p)
    else:
        if dropout_key is None:
            dropout_key = jax.random.PRNGKey(0)
        # One draw for the whole (padded) batch -> no per-tile mask correlation.
        u = jax.random.uniform(dropout_key, (b_pad, cout_p), dtype=jnp.float32)
        u_spec = pl.BlockSpec((tm, cout_p), lambda i: (i, 0))
        y_pad = pl.pallas_call(
            functools.partial(_fcn_train_kernel, p=p),
            out_shape=out_shape,
            grid=(nb,),
            in_specs=[x_spec, w_spec, bias_spec, u_spec],
            out_specs=o_spec,
            compiler_params=cparams,
        )(x_p, w_p, b_p, u)

    return y_pad[:B, :cout]


# ----------------------------------------------------------------------------
# Main
# ----------------------------------------------------------------------------
if __name__ == "__main__":
    key = jax.random.PRNGKey(0)
    k_x, k_w, k_b, k_d = jax.random.split(key, 4)

    B, cin, cout = 8, 32, 16  # small shapes consistent with FCN(cin, cout)

    x = jax.random.normal(k_x, (B, cin), dtype=jnp.float32)
    # PyTorch nn.Linear default init: U(-1/sqrt(cin), 1/sqrt(cin)).
    bound = 1.0 / (cin ** 0.5)
    w = jax.random.uniform(k_w, (cout, cin), jnp.float32, -bound, bound)  # torch layout
    b = jax.random.uniform(k_b, (cout,), jnp.float32, -bound, bound)
    w_t = w.T  # [cin, cout] for the kernel

    ref = x @ w_t + b

    # 1) Eval mode (dropout = identity): deterministic, checked exactly.
    out = jax.block_until_ready(fcn_forward(x, w_t, b, training=False))
    assert out.shape == (B, cout)
    assert jnp.allclose(out, ref, atol=1e-5, rtol=1e-5), "mismatch vs reference linear"

    # 2) bf16 compute path (recommended on v6e/v7x MXU), f32 accumulation.
    out_bf16 = jax.block_until_ready(
        fcn_forward(x, w_t, b, training=False, compute_dtype=jnp.bfloat16))
    assert out_bf16.shape == (B, cout)
    assert jnp.allclose(out_bf16, ref, atol=1e-1, rtol=1e-1), "bf16 path diverged"

    # 3) Training mode (p=0.5): every element is either 0 (dropped) or
    #    2 * (x @ W^T + b) (kept, scale folded into W/b).
    out_tr = jax.block_until_ready(
        fcn_forward(x, w_t, b, training=True, p=0.5, dropout_key=k_d))
    assert out_tr.shape == (B, cout)
    kept_val = 2.0 * ref
    is_zero = jnp.isclose(out_tr, 0.0, atol=1e-6)
    is_kept = jnp.isclose(out_tr, kept_val, atol=1e-4, rtol=1e-4)
    assert bool(jnp.all(is_zero | is_kept)), "dropout output not {0, 2*linear}"

    print("KERNEL_OK")
</pallas_src>

<mosaic_0001>
module attributes {stable_mosaic.version = 11 : i64} {
  func.func @_fcn_eval_kernel(%arg0: i32, %arg1: memref<8x128xf32, #tpu.memory_space<vmem>>, %arg2: memref<128x128xf32, #tpu.memory_space<vmem>>, %arg3: memref<1x128xf32, #tpu.memory_space<vmem>>, %arg4: memref<8x128xf32, #tpu.memory_space<vmem>>) attributes {dimension_semantics = [#tpu.dimension_semantics<parallel>], iteration_bounds = array<i64: 1>, scalar_prefetch = 0 : i64, scratch_operands = 0 : i64, tpu.core_type = #tpu.core_type<tc>, window_params = [{transform_indices = @transform_0, window_bounds = array<i64: 8, 128>}, {pipeline_mode = #tpu.pipeline_mode<synchronous>, transform_indices = @transform_1, window_bounds = array<i64: 128, 128>}, {pipeline_mode = #tpu.pipeline_mode<synchronous>, transform_indices = @transform_2, window_bounds = array<i64: 1, 128>}, {transform_indices = @transform_3, window_bounds = array<i64: 8, 128>}]} {
    %c0 = arith.constant 0 : index
    %c0_0 = arith.constant 0 : index
    %0 = vector.load %arg1[%c0, %c0_0] : memref<8x128xf32, #tpu.memory_space<vmem>>, vector<8x128xf32>
    %c0_1 = arith.constant 0 : index
    %c0_2 = arith.constant 0 : index
    %1 = vector.load %arg2[%c0_1, %c0_2] : memref<128x128xf32, #tpu.memory_space<vmem>>, vector<128x128xf32>
    %cst = arith.constant dense<0.000000e+00> : vector<8x128xf32>
    %2 = tpu.matmul %0, %1, %cst {dimension_numbers = #tpu.dot_dimension_numbers<[1], [0], [0], [1], [0, 0, 1, 1], [], []>} : vector<8x128xf32>, vector<128x128xf32>, vector<8x128xf32> -> vector<8x128xf32>
    %c0_3 = arith.constant 0 : index
    %c0_4 = arith.constant 0 : index
    %3 = vector.load %arg3[%c0_3, %c0_4] : memref<1x128xf32, #tpu.memory_space<vmem>>, vector<1x128xf32>
    %4 = vector.broadcast %3 : vector<1x128xf32> to vector<8x128xf32>
    %5 = arith.addf %2, %4 : vector<8x128xf32>
    %c0_5 = arith.constant 0 : index
    %c0_6 = arith.constant 0 : index
    %6 = vector.load %arg4[%c0_5, %c0_6] : memref<8x128xf32, #tpu.memory_space<vmem>>, vector<8x128xf32>
    tpu.vector_store %arg4[%c0_5, %c0_6], %5 {strides = array<i32>} : memref<8x128xf32, #tpu.memory_space<vmem>>, vector<8x128xf32>,
    return
  }
  func.func @transform_0(%arg0: i32) -> (i32, i32) {
    %c0_i32 = arith.constant 0 : i32
    %c0_i32_0 = arith.constant 0 : i32
    return %arg0, %c0_i32 : i32, i32
  }
  func.func @transform_1(%arg0: i32) -> (i32, i32) {
    %c0_i32 = arith.constant 0 : i32
    %c0_i32_0 = arith.constant 0 : i32
    %c0_i32_1 = arith.constant 0 : i32
    return %c0_i32, %c0_i32_0 : i32, i32
  }
  func.func @transform_2(%arg0: i32) -> (i32, i32) {
    %c0_i32 = arith.constant 0 : i32
    %c0_i32_0 = arith.constant 0 : i32
    %c0_i32_1 = arith.constant 0 : i32
    return %c0_i32, %c0_i32_0 : i32, i32
  }
  func.func @transform_3(%arg0: i32) -> (i32, i32) {
    %c0_i32 = arith.constant 0 : i32
    %c0_i32_0 = arith.constant 0 : i32
    return %arg0, %c0_i32 : i32, i32
  }
}

</mosaic_0001>

<llo_original>
// kernel: tpu_custom_call.1
$region0: #{tpu_custom_call.1}
  #allocation0 [shape = 'u32[]', space=smem, size = 0x4, offset = 0x4, fixed_abs, tag = 'smem constant byte address 0x4 - core index']
  #allocation1 [shape = 'u32[72,128]{1,0:T(1,128)}', space=vmem, size = 0x9000, scoped, tag = 'internal scratch']
  %s0 = inlined_call_operand.hbm [shape: f32[8,128], index: 0, kind: input, shape index: {}]
  %s1 = inlined_call_operand.hbm [shape: f32[128,128], index: 1, kind: input, shape index: {}]
  %s2 = inlined_call_operand.vmem [shape: f32[1,128], index: 2, kind: input, shape index: {}]
  %s3 = inlined_call_operand.hbm [shape: f32[8,128], index: 3, kind: output, shape index: {}]
  %s4 = sld [smem:[#allocation0]]
  $region30: #{tpu_custom_call.1} parent=0
    _
  %s6 = ssub.s32 1, %s4
  %s7 = scalar_select 0, %s6, %s4
  $region1: #{tpu_custom_call.1} parent=0
    #allocation2 [shape = 'u8[4096]{0}', space=vmem, size = 0x1000, scoped, tag = 'input window, operand 0, single buffered']
    #allocation3 [shape = 's32[1]{0}', space=sflag, size = 0x4, scoped, tag = 'scoped memory for tpu_custom_call.1']
    #allocation4 [shape = 's32[1]{0}', space=sflag, size = 0x4, scoped, tag = 'scoped memory for tpu_custom_call.1']
    #allocation5 [shape = 'u8[65536]{0}', space=vmem, size = 0x10000, scoped, tag = 'input window, operand 1, single buffered']
    #allocation6 [shape = 's32[1]{0}', space=sflag, size = 0x4, scoped, tag = 'scoped memory for tpu_custom_call.1']
    #allocation7 [shape = 'u8[4096]{0}', space=vmem, size = 0x1000, scoped, tag = 'output window, operand 0, single buffered']
    %8 = vsyncpa [#allocation3], 0
    %9 = vsyncpa [#allocation6], 0
    %10 = vsyncpa [#allocation4], 0
    // Predicated region
    $region2: #{tpu_custom_call.1} parent=1 // pred_check
      _
    $region3: #{tpu_custom_call.1} parent=1 // pred_check_branch
      %12 = sbr.rel (0) target = $region5
    $region4: #{tpu_custom_call.1} parent=1 // pred_region
      %14 = vsyncadd [#allocation3], 0
      %s16 = sshll.u32 %s0, 4
      %s17 = int_to_ptr.hbm [resolvable:$true] %s16
      %s18 = sshll.u32 [#allocation2], 4
      %s19 = int_to_ptr.vmem [resolvable:$true] %s18
      %21 = dma.hbm_to_vmem [thread:$0]  %s17, 128, %s19, [#allocation3]
    $region5: #{tpu_custom_call.1} parent=1 // pred_fallthru
      _
    // Predicated region
    $region6: #{tpu_custom_call.1} parent=1 // pred_check
      _
    $region7: #{tpu_custom_call.1} parent=1 // pred_check_branch
      %23 = sbr.rel (0) target = $region9
    $region8: #{tpu_custom_call.1} parent=1 // pred_region
      %25 = vsyncadd [#allocation6], 0
      %s26 = sshll.u32 %s1, 4
      %s27 = int_to_ptr.hbm [resolvable:$true] %s26
      %s28 = sshll.u32 [#allocation5], 4
      %s29 = int_to_ptr.vmem [resolvable:$true] %s28
      %34 = dma.hbm_to_vmem [thread:$0]  %s27, 2048, %s29, [#allocation6], 128, 128, 8
    $region9: #{tpu_custom_call.1} parent=1 // pred_fallthru
      _
    // Predicated region
    $region10: #{tpu_custom_call.1} parent=1 // pred_check
      _
    $region11: #{tpu_custom_call.1} parent=1 // pred_check_branch
      %36 = sbr.rel (0) target = $region13
    $region12: #{tpu_custom_call.1} parent=1 // pred_region
      _
    $region13: #{tpu_custom_call.1} parent=1 // pred_fallthru
      _
    // Predicated region
    $region14: #{tpu_custom_call.1} parent=1 // pred_check
      _
    $region15: #{tpu_custom_call.1} parent=1 // pred_check_branch
      %38 = sbr.rel (0) target = $region17
    $region16: #{tpu_custom_call.1} parent=1 // pred_region
      %40 = dma.done [#allocation3], 128
    $region17: #{tpu_custom_call.1} parent=1 // pred_fallthru
      _
    // Predicated region
    $region18: #{tpu_custom_call.1} parent=1 // pred_check
      _
    $region19: #{tpu_custom_call.1} parent=1 // pred_check_branch
      %42 = sbr.rel (0) target = $region21
    $region20: #{tpu_custom_call.1} parent=1 // pred_region
      %44 = dma.done [#allocation6], 2048
    $region21: #{tpu_custom_call.1} parent=1 // pred_fallthru
      _
    %v45 = vld [vmem:[#allocation2] sm:$0xff]
    %v46 = vld [vmem:[#allocation5] sm:$0xff]
    %v47 = vld [vmem:[#allocation5 + $0x8] sm:$0xff]
    %v48 = vld [vmem:[#allocation5 + $0x10] sm:$0xff]
    %v49 = vld [vmem:[#allocation5 + $0x18] sm:$0xff]
    %v50 = vld [vmem:[#allocation5 + $0x20] sm:$0xff]
    %v51 = vld [vmem:[#allocation5 + $0x28] sm:$0xff]
    %v52 = vld [vmem:[#allocation5 + $0x30] sm:$0xff]
    %v53 = vld [vmem:[#allocation5 + $0x38] sm:$0xff]
    %v54 = vld [vmem:[#allocation5 + $0x40] sm:$0xff]
    %v55 = vld [vmem:[#allocation5 + $0x48] sm:$0xff]
    %v56 = vld [vmem:[#allocation5 + $0x50] sm:$0xff]
    %v57 = vld [vmem:[#allocation5 + $0x58] sm:$0xff]
    %v58 = vld [vmem:[#allocation5 + $0x60] sm:$0xff]
    %v59 = vld [vmem:[#allocation5 + $0x68] sm:$0xff]
    %v60 = vld [vmem:[#allocation5 + $0x70] sm:$0xff]
    %v61 = vld [vmem:[#allocation5 + $0x78] sm:$0xff]
    %v62 = vld [vmem:[%s2] sm:$0x1]
    %v64 = vperm.slane %v62, 0
    %66 = vmatpush.msra.mxu0 %v61
    %67 = vmatpush.msra.mxu0 %v60
    %68 = vmatpush.msra.mxu0 %v59
    %69 = vmatpush.msra.mxu0 %v58
    %70 = vmatpush.msra.mxu0 %v57
    %71 = vmatpush.msra.mxu0 %v56
    %72 = vmatpush.msra.mxu0 %v55
    %73 = vmatpush.msra.mxu0 %v54
    %74 = vmatpush.msra.mxu0 %v53
    %75 = vmatpush.msra.mxu0 %v52
    %76 = vmatpush.msra.mxu0 %v51
    %77 = vmatpush.msra.mxu0 %v50
    %78 = vmatpush.msra.mxu0 %v49
    %79 = vmatpush.msra.mxu0 %v48
    %80 = vmatpush.msra.mxu0 %v47
    %81 = vmatpush.msra.mxu0 %v46
    %82 = vmatmul.f32.gmra.mxu0 %v45
    %v83 = vpop.f32.mrf.mxu0
    %v84 = vadd.f32 %v64, %v83
    %85 = vdwg.mxu0
    %86 = vst [vmem:[#allocation7] sm:$0xff] %v84
    // Predicated region
    $region22: #{tpu_custom_call.1} parent=1 // pred_check
      _
    $region23: #{tpu_custom_call.1} parent=1 // pred_check_branch
      %88 = sbr.rel (0) target = $region25
    $region24: #{tpu_custom_call.1} parent=1 // pred_region
      %90 = vsyncadd [#allocation4], 0
      %s92 = sshll.u32 [#allocation7], 4
      %s93 = int_to_ptr.vmem [resolvable:$true] %s92
      %s94 = sshll.u32 %s3, 4
      %s95 = int_to_ptr.hbm [resolvable:$true] %s94
      %97 = dma.vmem_to_hbm [thread:$0]  %s93, 128, %s95, [#allocation4]
    $region25: #{tpu_custom_call.1} parent=1 // pred_fallthru
      _
    // Predicated region
    $region26: #{tpu_custom_call.1} parent=1 // pred_check
      _
    $region27: #{tpu_custom_call.1} parent=1 // pred_check_branch
      %99 = sbr.rel (0) target = $region29
    $region28: #{tpu_custom_call.1} parent=1 // pred_region
      %101 = dma.done [#allocation4], 128
    $region29: #{tpu_custom_call.1} parent=1 // pred_fallthru
      _
    %102 = vsyncpa [#allocation3], 1
    %103 = vsyncpa [#allocation6], 1
    %104 = vsyncpa [#allocation4], 1

</llo_original>
